<compile_context>
chip_gen: v7x
topology: tpu7x:2x2x1
jax: 0.10.0
libtpu: 0.0.40
codegen_flags: <defaults>
</compile_context>

<pallas_src>
import jax
import jax.numpy as jnp
import numpy as np
from jax.experimental import pallas as pl
from jax.experimental.pallas import tpu as pltpu


# ---------------------------------------------------------------------------
# Shared forward math on the prepared (flat, channel-last, pair-merged) layout.
# Used by the Pallas kernel (on VMEM tiles) and by the matched-precision JAX
# reference so layout / indexing can be checked tightly.
#
# Flat activation layout: a[b, p*C + c]  (position-major, channel-minor) ==
# row-major flattening of the channel-last (B, D, C) tensor.
# Layer weight: (n_chunks, g*2C, g*H) bf16, block-diagonal within each chunk;
# chunk q consumes flat columns [q*g*2C, (q+1)*g*2C) of the activation and
# produces flat columns [q*g*H, (q+1)*g*H) of the next activation.  The
# 1/sqrt(C_in) and 1/h scales are pre-folded into the weights / beta.
# ---------------------------------------------------------------------------
def _forward_math(a, layer_ws, chunk_meta, beta):
    for w, (n_chunks, ck, cn) in zip(layer_ws, chunk_meta):
        outs = []
        for q in range(n_chunks):                      # static, short unroll
            z = jnp.dot(a[:, q * ck:(q + 1) * ck], w[q],
                        preferred_element_type=jnp.float32)
            outs.append(jnp.maximum(z, 0.0).astype(jnp.bfloat16))
        a = outs[0] if n_chunks == 1 else jnp.concatenate(outs, axis=1)
    # After the last layer the spatial dim is 1, so the PyTorch mean over the
    # length-1 spatial dim is the identity; the 1/h factor is folded into beta.
    return jnp.dot(a, beta, preferred_element_type=jnp.float32)


def _make_kernel(num_layers, chunk_meta):
    def kernel(x_ref, *refs):
        w_vals = [refs[l][...] for l in range(num_layers)]   # bf16 VMEM tiles
        beta_val = refs[num_layers][...]
        out_ref = refs[num_layers + 1]
        out_ref[...] = _forward_math(x_ref[...], w_vals, chunk_meta, beta_val)
    return kernel


# ---------------------------------------------------------------------------
# Wrapper-side preparation (glue, runs once per call under jit): layout
# transposes, pair merging, scale folding, bf16 cast, chunked block-diagonal
# widening of weights.
# ---------------------------------------------------------------------------
def _prepare(x, weights, beta, target_k, max_chunk_bytes):
    B, C0, d = x.shape
    num_layers = len(weights)
    if d != 2 ** num_layers:
        raise ValueError(f"input spatial size {d} must equal 2**num_layers "
                         f"= {2 ** num_layers}")
    h, out_dim = beta.shape
    layer_ws, chunk_meta, feat_widths = [], [], [d * C0]
    for l, w in enumerate(weights):
        H_out, C_in, D_in = w.shape
        if D_in != d // (2 ** l):
            raise ValueError(f"layer {l}: expected spatial size {d // 2 ** l}, "
                             f"got {D_in}")
        J, K = D_in // 2, 2 * C_in
        # (H, C, D) -> (D, C, H) -> (J, 2C, H); k = parity*C + c matches the
        # flat activation index p*C + c with p = 2j + parity.  Fold 1/sqrt(C_in)
        # into the weight in f32 before the bf16 cast.
        wp = (jnp.transpose(w, (2, 1, 0)).reshape(J, K, H_out)
              * (1.0 / float(np.sqrt(C_in)))).astype(jnp.bfloat16)
        # Group size g (power of two dividing J): contraction depth g*2C targets
        # the MXU K-tile; cap so a single chunk's bf16 weight stays small.
        g = 1
        while (g < J and (2 * g) * K <= target_k
               and (2 * g) * K * (2 * g) * H_out * 2 <= max_chunk_bytes):
            g *= 2
        n_chunks = J // g
        # Block-diagonal widening of each chunk: (n_chunks, g*2C, g*H).
        eye = jnp.eye(g, dtype=wp.dtype)
        wc = jnp.einsum('qjkh,ji->qjkih',
                        wp.reshape(n_chunks, g, K, H_out), eye)
        layer_ws.append(wc.reshape(n_chunks, g * K, g * H_out))
        chunk_meta.append((n_chunks, g * K, g * H_out))
        feat_widths.append(J * H_out)
    # (B, C, d) -> (B, d, C) -> flat (B, d*C): index = p*C + c.
    x_p = jnp.transpose(x, (0, 2, 1)).reshape(B, d * C0).astype(jnp.bfloat16)
    beta_p = (beta * (1.0 / float(h))).astype(jnp.bfloat16)      # fold 1/h
    return x_p, layer_ws, chunk_meta, beta_p, feat_widths, out_dim


def _hw_params():
    """(vmem_limit_bytes, mxu K-target) for the current chip, with safe
    fallbacks: ~48 MiB / K=256 if the chip cannot be identified (v7x-safe)."""
    kind = ""
    try:
        kind = jax.devices()[0].device_kind.lower()
    except Exception:
        pass
    vmem_cap = None
    try:
        vmem_cap = int(pltpu.get_tpu_info().vmem_capacity_bytes)
    except Exception:
        vmem_cap = None
    if vmem_cap is None:
        vmem_cap = 64 * 1024 * 1024       # conservative: v7x per-TC VMEM
    # 96 MiB on 128-MiB parts (v5e/v6e), 48 MiB on 64-MiB parts (v7x).
    vmem_limit = int(min(96 * 1024 * 1024,
                         max(32 * 1024 * 1024, (vmem_cap * 3) // 4)))
    target_k = 128 if "v5" in kind else 256     # 4x128^2 MXU vs 2x256^2 MXU
    return vmem_limit, target_k


def _pick_block_b(B, block_b, act_row_bytes, weight_bytes, vmem_limit):
    if block_b is not None and B % block_b == 0:
        return block_b
    budget = max(vmem_limit - weight_bytes - (4 << 20), 1 << 20)
    cap = max(budget // max(act_row_bytes, 1), 8)
    cands = [c for c in (512, 256, 128, 64, 32, 16, 8)
             if B % c == 0 and c <= cap]
    # Prefer a grid of >= 2 batch blocks so the "parallel" grid axis can feed
    # both TensorCores on v7x; otherwise take the largest fitting block.
    split = [c for c in cands if c < B]
    if split:
        return split[0]
    if cands:
        return cands[0]
    return B                               # full-B block is always legal


def locally_hierarchical_net(x, weights, beta, *, block_b=None,
                             max_chunk_bytes=2 * 1024 * 1024):
    """x: (B, C0, d) NCW as in PyTorch; weights[l]: (h, C_in, D_in) torch layout;
    beta: (h, out_dim).  Returns (B, out_dim) float32."""
    B = x.shape[0]
    vmem_limit, target_k = _hw_params()
    x_p, layer_ws, chunk_meta, beta_p, feat_widths, out_dim = _prepare(
        x, weights, beta, target_k, max_chunk_bytes)
    num_layers = len(layer_ws)
    feat0 = x_p.shape[1]

    # VMEM budget: weights + beta (grid-constant but double-buffered by the
    # default pipeline -> x2), input tile (bf16, x2 buffers), widest f32
    # intermediate + its bf16 copy, output tile (f32, x2 buffers).
    weight_bytes = (sum(int(np.prod(w.shape)) for w in layer_ws)
                    + int(np.prod(beta_p.shape))) * 2 * 2
    max_feat = max(feat_widths)
    row_bytes = 2 * 2 * feat0 + 6 * max_feat + 2 * 4 * out_dim
    block_b = _pick_block_b(B, block_b, row_bytes, weight_bytes, vmem_limit)
    grid = (B // block_b,)

    in_specs = [pl.BlockSpec((block_b, feat0), lambda i: (i, 0))]
    in_specs += [pl.BlockSpec(w.shape, lambda i: (0, 0, 0)) for w in layer_ws]
    in_specs += [pl.BlockSpec(beta_p.shape, lambda i: (0, 0))]
    out_specs = pl.BlockSpec((block_b, out_dim), lambda i: (i, 0))

    # Advisory cost estimate from the REAL (non-zero) layer work, not the
    # widened block-diagonal FLOPs.
    h = beta.shape[0]
    flops = 2 * B * h * out_dim
    for w in weights:
        H_out, C_in, D_in = w.shape
        flops += 2 * B * (D_in // 2) * (2 * C_in) * H_out
    bytes_accessed = (int(np.prod(x_p.shape))
                      + sum(int(np.prod(w.shape)) for w in layer_ws)
                      + int(np.prod(beta_p.shape))) * 2 + B * out_dim * 4

    kernel = _make_kernel(num_layers, chunk_meta)
    return pl.pallas_call(
        kernel,
        out_shape=jax.ShapeDtypeStruct((B, out_dim), jnp.float32),
        grid=grid,
        in_specs=in_specs,
        out_specs=out_specs,
        compiler_params=pltpu.CompilerParams(
            dimension_semantics=("parallel",),      # shard B blocks across TCs
            vmem_limit_bytes=vmem_limit,
        ),
        cost_estimate=pl.CostEstimate(flops=flops, transcendentals=0,
                                      bytes_accessed=bytes_accessed),
    )(x_p, *layer_ws, beta_p)


# ---------------------------------------------------------------------------
# References.
# ---------------------------------------------------------------------------
def _lc_ref(x, w, c_in):
    t = x[:, None, :, :] * w[None]                 # (B, O, C, D)
    t = t.reshape(*t.shape[:-1], -1, 2)            # (B, O, C, D//2, 2)
    t = t.sum(axis=(-1, -3))                       # (B, O, D//2)
    return t / (c_in ** 0.5)


def net_ref_f32(x, weights, beta):
    """Exact f32 mirror of the PyTorch module (NCW layout)."""
    a = x
    for w in weights:
        a = jax.nn.relu(_lc_ref(a, w, a.shape[1]))
    y = a.mean(axis=-1)
    return y @ beta / beta.shape[0]


def net_ref_mixed(x, weights, beta, target_k=256,
                  max_chunk_bytes=2 * 1024 * 1024):
    """Pure-JAX reference with the kernel's exact layout/chunking and the same
    bf16-operand / f32-accumulate dtype policy."""
    x_p, layer_ws, chunk_meta, beta_p, _, _ = _prepare(
        x, weights, beta, target_k, max_chunk_bytes)
    return _forward_math(x_p, layer_ws, chunk_meta, beta_p)


if __name__ == "__main__":
    # Small shapes consistent with the module (bias=False, the default).
    # h=128 is chosen so both widened-chunk (layer 0) and deep-K per-pair
    # chunks with an in-kernel concat (layer 1) are exercised.
    B, C0, h, num_layers, out_dim = 32, 4, 128, 3, 10
    d = 2 ** num_layers                                    # input spatial size

    key = jax.random.PRNGKey(0)
    keys = jax.random.split(key, num_layers + 2)
    x = jax.random.normal(keys[0], (B, C0, d), jnp.float32)

    weights = []
    for l in range(num_layers):
        c_in = C0 if l == 0 else h
        d_in = d // (2 ** l)
        weights.append(
            jax.random.normal(keys[1 + l], (h, c_in, d_in), jnp.float32))
    beta = jax.random.normal(keys[-1], (h, out_dim), jnp.float32)

    net = jax.jit(locally_hierarchical_net,
                  static_argnames=("block_b", "max_chunk_bytes"))
    out = jax.block_until_ready(net(x, weights, beta))   # auto block_b -> grid of 2

    # 1) Tight check against a matched-precision (same chunking, bf16 operands,
    #    f32 accum) reference: catches any layout / indexing / pairing bug.
    _, target_k = _hw_params()
    ref_mixed = net_ref_mixed(x, weights, beta, target_k=target_k)
    np.testing.assert_allclose(np.asarray(out), np.asarray(ref_mixed),
                               rtol=2e-3, atol=2e-3)

    # 2) Semantic check against the exact f32 PyTorch-equivalent forward; the
    #    tolerance reflects bf16 MXU-operand quantization only.
    ref_f32 = net_ref_f32(x, weights, beta)
    np.testing.assert_allclose(np.asarray(out), np.asarray(ref_f32),
                               rtol=2e-2, atol=5e-2)

    print("KERNEL_OK")
</pallas_src>

<mosaic_0001>
module attributes {stable_mosaic.version = 11 : i64} {
  func.func @kernel(%arg0: i32, %arg1: memref<16x32xbf16, #tpu.memory_space<vmem>>, %arg2: memref<1x32x512xbf16, #tpu.memory_space<vmem>>, %arg3: memref<2x256x128xbf16, #tpu.memory_space<vmem>>, %arg4: memref<1x256x128xbf16, #tpu.memory_space<vmem>>, %arg5: memref<128x10xbf16, #tpu.memory_space<vmem>>, %arg6: memref<16x10xf32, #tpu.memory_space<vmem>>) attributes {dimension_semantics = [#tpu.dimension_semantics<parallel>], iteration_bounds = array<i64: 2>, scalar_prefetch = 0 : i64, scratch_operands = 0 : i64, tpu.core_type = #tpu.core_type<tc>, window_params = [{transform_indices = @transform_0, window_bounds = array<i64: 16, 32>}, {pipeline_mode = #tpu.pipeline_mode<synchronous>, transform_indices = @transform_1, window_bounds = array<i64: 1, 32, 512>}, {pipeline_mode = #tpu.pipeline_mode<synchronous>, transform_indices = @transform_2, window_bounds = array<i64: 2, 256, 128>}, {pipeline_mode = #tpu.pipeline_mode<synchronous>, transform_indices = @transform_3, window_bounds = array<i64: 1, 256, 128>}, {pipeline_mode = #tpu.pipeline_mode<synchronous>, transform_indices = @transform_4, window_bounds = array<i64: 128, 10>}, {transform_indices = @transform_5, window_bounds = array<i64: 16, 10>}]} {
    %c0 = arith.constant 0 : index
    %c0_0 = arith.constant 0 : index
    %c0_1 = arith.constant 0 : index
    %0 = vector.load %arg2[%c0, %c0_0, %c0_1] : memref<1x32x512xbf16, #tpu.memory_space<vmem>>, vector<1x32x512xbf16>
    %c0_2 = arith.constant 0 : index
    %c0_3 = arith.constant 0 : index
    %c0_4 = arith.constant 0 : index
    %1 = vector.load %arg3[%c0_2, %c0_3, %c0_4] : memref<2x256x128xbf16, #tpu.memory_space<vmem>>, vector<2x256x128xbf16>
    %c0_5 = arith.constant 0 : index
    %c0_6 = arith.constant 0 : index
    %c0_7 = arith.constant 0 : index
    %2 = vector.load %arg4[%c0_5, %c0_6, %c0_7] : memref<1x256x128xbf16, #tpu.memory_space<vmem>>, vector<1x256x128xbf16>
    %c0_8 = arith.constant 0 : index
    %c0_9 = arith.constant 0 : index
    %3 = vector.load %arg5[%c0_8, %c0_9] : memref<128x10xbf16, #tpu.memory_space<vmem>>, vector<128x10xbf16>
    %c0_10 = arith.constant 0 : index
    %c0_11 = arith.constant 0 : index
    %4 = vector.load %arg1[%c0_10, %c0_11] : memref<16x32xbf16, #tpu.memory_space<vmem>>, vector<16x32xbf16>
    %5 = vector.shape_cast %0 : vector<1x32x512xbf16> to vector<32x512xbf16>
    %cst = arith.constant dense<0.000000e+00> : vector<16x512xf32>
    %6 = tpu.matmul %4, %5, %cst {dimension_numbers = #tpu.dot_dimension_numbers<[1], [0], [0], [1], [0, 0, 1, 1], [], []>} : vector<16x32xbf16>, vector<32x512xbf16>, vector<16x512xf32> -> vector<16x512xf32>
    %cst_12 = arith.constant 0.000000e+00 : f32
    %7 = vector.broadcast %cst_12 : f32 to vector<16x512xf32>
    %8 = arith.maximumf %6, %7 : vector<16x512xf32>
    %9 = arith.truncf %8 : vector<16x512xf32> to vector<16x512xbf16>
    %10 = vector.extract_strided_slice %9 {offsets = [0, 0], sizes = [16, 256], strides = [1, 1]} : vector<16x512xbf16> to vector<16x256xbf16>
    %11 = vector.extract_strided_slice %1 {offsets = [0, 0, 0], sizes = [1, 256, 128], strides = [1, 1, 1]} : vector<2x256x128xbf16> to vector<1x256x128xbf16>
    %12 = vector.shape_cast %11 : vector<1x256x128xbf16> to vector<256x128xbf16>
    %cst_13 = arith.constant dense<0.000000e+00> : vector<16x128xf32>
    %13 = tpu.matmul %10, %12, %cst_13 {dimension_numbers = #tpu.dot_dimension_numbers<[1], [0], [0], [1], [0, 0, 1, 1], [], []>} : vector<16x256xbf16>, vector<256x128xbf16>, vector<16x128xf32> -> vector<16x128xf32>
    %cst_14 = arith.constant 0.000000e+00 : f32
    %14 = vector.broadcast %cst_14 : f32 to vector<16x128xf32>
    %15 = arith.maximumf %13, %14 : vector<16x128xf32>
    %16 = arith.truncf %15 : vector<16x128xf32> to vector<16x128xbf16>
    %17 = vector.extract_strided_slice %9 {offsets = [0, 256], sizes = [16, 256], strides = [1, 1]} : vector<16x512xbf16> to vector<16x256xbf16>
    %18 = vector.extract_strided_slice %1 {offsets = [1, 0, 0], sizes = [1, 256, 128], strides = [1, 1, 1]} : vector<2x256x128xbf16> to vector<1x256x128xbf16>
    %19 = vector.shape_cast %18 : vector<1x256x128xbf16> to vector<256x128xbf16>
    %cst_15 = arith.constant dense<0.000000e+00> : vector<16x128xf32>
    %20 = tpu.matmul %17, %19, %cst_15 {dimension_numbers = #tpu.dot_dimension_numbers<[1], [0], [0], [1], [0, 0, 1, 1], [], []>} : vector<16x256xbf16>, vector<256x128xbf16>, vector<16x128xf32> -> vector<16x128xf32>
    %cst_16 = arith.constant 0.000000e+00 : f32
    %21 = vector.broadcast %cst_16 : f32 to vector<16x128xf32>
    %22 = arith.maximumf %20, %21 : vector<16x128xf32>
    %23 = arith.truncf %22 : vector<16x128xf32> to vector<16x128xbf16>
    %24 = tpu.concatenate %16, %23 in 1 : vector<16x128xbf16>, vector<16x128xbf16> -> vector<16x256xbf16>
    %25 = vector.shape_cast %2 : vector<1x256x128xbf16> to vector<256x128xbf16>
    %cst_17 = arith.constant dense<0.000000e+00> : vector<16x128xf32>
    %26 = tpu.matmul %24, %25, %cst_17 {dimension_numbers = #tpu.dot_dimension_numbers<[1], [0], [0], [1], [0, 0, 1, 1], [], []>} : vector<16x256xbf16>, vector<256x128xbf16>, vector<16x128xf32> -> vector<16x128xf32>
    %cst_18 = arith.constant 0.000000e+00 : f32
    %27 = vector.broadcast %cst_18 : f32 to vector<16x128xf32>
    %28 = arith.maximumf %26, %27 : vector<16x128xf32>
    %29 = arith.truncf %28 : vector<16x128xf32> to vector<16x128xbf16>
    %cst_19 = arith.constant dense<0.000000e+00> : vector<16x10xf32>
    %30 = tpu.matmul %29, %3, %cst_19 {dimension_numbers = #tpu.dot_dimension_numbers<[1], [0], [0], [1], [0, 0, 1, 1], [], []>} : vector<16x128xbf16>, vector<128x10xbf16>, vector<16x10xf32> -> vector<16x10xf32>
    %c0_20 = arith.constant 0 : index
    %c0_21 = arith.constant 0 : index
    %31 = vector.load %arg6[%c0_20, %c0_21] : memref<16x10xf32, #tpu.memory_space<vmem>>, vector<16x10xf32>
    tpu.vector_store %arg6[%c0_20, %c0_21], %30 {strides = array<i32>} : memref<16x10xf32, #tpu.memory_space<vmem>>, vector<16x10xf32>,
    return
  }
  func.func @transform_0(%arg0: i32) -> (i32, i32) {
    %c0_i32 = arith.constant 0 : i32
    %c0_i32_0 = arith.constant 0 : i32
    return %arg0, %c0_i32 : i32, i32
  }
  func.func @transform_1(%arg0: i32) -> (i32, i32, i32) {
    %c0_i32 = arith.constant 0 : i32
    %c0_i32_0 = arith.constant 0 : i32
    %c0_i32_1 = arith.constant 0 : i32
    %c0_i32_2 = arith.constant 0 : i32
    return %c0_i32, %c0_i32_0, %c0_i32_1 : i32, i32, i32
  }
  func.func @transform_2(%arg0: i32) -> (i32, i32, i32) {
    %c0_i32 = arith.constant 0 : i32
    %c0_i32_0 = arith.constant 0 : i32
    %c0_i32_1 = arith.constant 0 : i32
    %c0_i32_2 = arith.constant 0 : i32
    return %c0_i32, %c0_i32_0, %c0_i32_1 : i32, i32, i32
  }
  func.func @transform_3(%arg0: i32) -> (i32, i32, i32) {
    %c0_i32 = arith.constant 0 : i32
    %c0_i32_0 = arith.constant 0 : i32
    %c0_i32_1 = arith.constant 0 : i32
    %c0_i32_2 = arith.constant 0 : i32
    return %c0_i32, %c0_i32_0, %c0_i32_1 : i32, i32, i32
  }
  func.func @transform_4(%arg0: i32) -> (i32, i32) {
    %c0_i32 = arith.constant 0 : i32
    %c0_i32_0 = arith.constant 0 : i32
    %c0_i32_1 = arith.constant 0 : i32
    return %c0_i32, %c0_i32_0 : i32, i32
  }
  func.func @transform_5(%arg0: i32) -> (i32, i32) {
    %c0_i32 = arith.constant 0 : i32
    %c0_i32_0 = arith.constant 0 : i32
    return %arg0, %c0_i32 : i32, i32
  }
}

</mosaic_0001>

<llo_original>
// kernel: locally_hierarchical_net.1
$region0: #{locally_hierarchical_net.1}
  #allocation0 [shape = 'u32[]', space=smem, size = 0x4, offset = 0x4, fixed_abs, tag = 'smem constant byte address 0x4 - core index']
  #allocation1 [shape = 'u32[144,128]{1,0:T(1,128)}', space=vmem, size = 0x12000, scoped, tag = 'internal scratch']
  %s0 = inlined_call_operand.vmem [shape: bf16[32,32], index: 0, kind: input, shape index: {}]
  %s1 = inlined_call_operand.vmem [shape: bf16[1,32,512], index: 1, kind: input, shape index: {}]
  %s2 = inlined_call_operand.vmem [shape: bf16[2,256,128], index: 2, kind: input, shape index: {}]
  %s3 = inlined_call_operand.vmem [shape: bf16[1,256,128], index: 3, kind: input, shape index: {}]
  %s4 = inlined_call_operand.vmem [shape: bf16[128,10], index: 4, kind: input, shape index: {}]
  %s5 = inlined_call_operand.vmem [shape: f32[32,10], index: 5, kind: output, shape index: {}]
  %s6 = sld [smem:[#allocation0]]
  $region53: #{locally_hierarchical_net.1} parent=0
    _
  %s8 = ssub.s32 1, %s6
  %s9 = scalar_select 0, %s8, %s6
  loop: start=0, step=1, limit=4
  $region2: #{locally_hierarchical_net.1} parent=0 // loop_pre_header
    _
  $region3: #{locally_hierarchical_net.1} parent=0 // loop_header
    %s11 = sphi 0, %s15
    %p12 = scmp.ge.s32.totalorder %s11, 4
    %s21 = sphi 0, %s23
    %s24 = sphi 0, %s21
    %s25 = sphi 0, %s24
    %s41 = sphi 0, %s25
    %s45 = sphi 0, %s45
    %s47 = sphi 0, %s45
    %s48 = sphi 0, %s47
    %s62 = sphi 0, %s48
    %s66 = sphi 0, %s66
    %s68 = sphi 0, %s66
    %s69 = sphi 0, %s68
    %s83 = sphi 0, %s69
    %s87 = sphi 0, %s87
    %s89 = sphi 0, %s87
    %s90 = sphi 0, %s89
    %s104 = sphi 0, %s90
    %s108 = sphi 0, %s108
    %s110 = sphi 0, %s108
    %s111 = sphi 0, %s110
    %s125 = sphi 0, %s111
    %s131 = sphi 0, %s133
    %s134 = sphi 0, %s131
    %s135 = sphi 0, %s134
    %s151 = sphi 0, %s135
  $region4: #{locally_hierarchical_net.1} parent=0 // loop_header_branch
    %14 = sbr.rel (%p12) target = $region8
  $region5: #{locally_hierarchical_net.1} parent=0 // loop_body
    %s16 = ssub.s32 %s11, 1
    %s17 = ssub.s32 %s11, 2
    %s18 = sadd.s32 %s11, 1
    %s19 = ssub.s32 %s11, %s18
    %p20 = scmp.eq.s32.totalorder %s19, 0
    %s22 = sadd.s32 %s21, 1
    %s23 = scalar_select %p20, %s21, %s22
    %p26 = pneg %p20
    %p27 = scmp.eq.s32.totalorder %s11, 1
    %p28 = por %p26, %p27
    %p29 = scmp.ne.s32.totalorder %s21, %s24
    %p30 = scmp.eq.s32.totalorder %s11, 0
    %p31 = por %p29, %p30
    %p32 = scmp.ne.s32.totalorder %s21, %s24
    %p33 = scmp.eq.s32.totalorder %s16, 1
    %p34 = por %p32, %p33
    %p35 = scmp.ne.s32.totalorder %s24, %s25
    %p36 = scmp.eq.s32.totalorder %s16, 0
    %p37 = por %p35, %p36
    %p38 = scmp.ne.s32.totalorder %s24, %s25
    %p39 = scmp.eq.s32.totalorder %s17, 1
    %p40 = por %p38, %p39
    %p42 = scmp.ne.s32.totalorder %s25, %s41
    %p43 = scmp.eq.s32.totalorder %s17, 0
    %p44 = por %p42, %p43
    %s46 = sadd.s32 %s45, 1
    %p49 = scmp.eq.s32.totalorder %s11, 1
    %p50 = scmp.ne.s32.totalorder %s45, %s47
    %p51 = scmp.eq.s32.totalorder %s11, 0
    %p52 = por %p50, %p51
    %p53 = scmp.ne.s32.totalorder %s45, %s47
    %p54 = scmp.eq.s32.totalorder %s16, 1
    %p55 = por %p53, %p54
    %p56 = scmp.ne.s32.totalorder %s47, %s48
    %p57 = scmp.eq.s32.totalorder %s16, 0
    %p58 = por %p56, %p57
    %p59 = scmp.ne.s32.totalorder %s47, %s48
    %p60 = scmp.eq.s32.totalorder %s17, 1
    %p61 = por %p59, %p60
    %p63 = scmp.ne.s32.totalorder %s48, %s62
    %p64 = scmp.eq.s32.totalorder %s17, 0
    %p65 = por %p63, %p64
    %s67 = sadd.s32 %s66, 1
    %p70 = scmp.eq.s32.totalorder %s11, 1
    %p71 = scmp.ne.s32.totalorder %s66, %s68
    %p72 = scmp.eq.s32.totalorder %s11, 0
    %p73 = por %p71, %p72
    %p74 = scmp.ne.s32.totalorder %s66, %s68
    %p75 = scmp.eq.s32.totalorder %s16, 1
    %p76 = por %p74, %p75
    %p77 = scmp.ne.s32.totalorder %s68, %s69
    %p78 = scmp.eq.s32.totalorder %s16, 0
    %p79 = por %p77, %p78
    %p80 = scmp.ne.s32.totalorder %s68, %s69
    %p81 = scmp.eq.s32.totalorder %s17, 1
    %p82 = por %p80, %p81
    %p84 = scmp.ne.s32.totalorder %s69, %s83
    %p85 = scmp.eq.s32.totalorder %s17, 0
    %p86 = por %p84, %p85
    %s88 = sadd.s32 %s87, 1
    %p91 = scmp.eq.s32.totalorder %s11, 1
    %p92 = scmp.ne.s32.totalorder %s87, %s89
    %p93 = scmp.eq.s32.totalorder %s11, 0
    %p94 = por %p92, %p93
    %p95 = scmp.ne.s32.totalorder %s87, %s89
    %p96 = scmp.eq.s32.totalorder %s16, 1
    %p97 = por %p95, %p96
    %p98 = scmp.ne.s32.totalorder %s89, %s90
    %p99 = scmp.eq.s32.totalorder %s16, 0
    %p100 = por %p98, %p99
    %p101 = scmp.ne.s32.totalorder %s89, %s90
    %p102 = scmp.eq.s32.totalorder %s17, 1
    %p103 = por %p101, %p102
    %p105 = scmp.ne.s32.totalorder %s90, %s104
    %p106 = scmp.eq.s32.totalorder %s17, 0
    %p107 = por %p105, %p106
    %s109 = sadd.s32 %s108, 1
    %p112 = scmp.eq.s32.totalorder %s11, 1
    %p113 = scmp.ne.s32.totalorder %s108, %s110
    %p114 = scmp.eq.s32.totalorder %s11, 0
    %p115 = por %p113, %p114
    %p116 = scmp.ne.s32.totalorder %s108, %s110
    %p117 = scmp.eq.s32.totalorder %s16, 1
    %p118 = por %p116, %p117
    %p119 = scmp.ne.s32.totalorder %s110, %s111
    %p120 = scmp.eq.s32.totalorder %s16, 0
    %p121 = por %p119, %p120
    %p122 = scmp.ne.s32.totalorder %s110, %s111
    %p123 = scmp.eq.s32.totalorder %s17, 1
    %p124 = por %p122, %p123
    %p126 = scmp.ne.s32.totalorder %s111, %s125
    %p127 = scmp.eq.s32.totalorder %s17, 0
    %p128 = por %p126, %p127
    %s129 = ssub.s32 %s11, %s18
    %p130 = scmp.eq.s32.totalorder %s129, 0
    %s132 = sadd.s32 %s131, 1
    %s133 = scalar_select %p130, %s131, %s132
    %p136 = pneg %p130
    %p137 = scmp.eq.s32.totalorder %s11, 1
    %p138 = por %p136, %p137
    %p139 = scmp.ne.s32.totalorder %s131, %s134
    %p140 = scmp.eq.s32.totalorder %s11, 0
    %p141 = por %p139, %p140
    %p142 = scmp.ne.s32.totalorder %s131, %s134
    %p143 = scmp.eq.s32.totalorder %s16, 1
    %p144 = por %p142, %p143
    %p145 = scmp.ne.s32.totalorder %s134, %s135
    %p146 = scmp.eq.s32.totalorder %s16, 0
    %p147 = por %p145, %p146
    %p148 = scmp.ne.s32.totalorder %s134, %s135
    %p149 = scmp.eq.s32.totalorder %s17, 1
    %p150 = por %p148, %p149
    %p152 = scmp.ne.s32.totalorder %s135, %s151
    %p153 = scmp.eq.s32.totalorder %s17, 0
    %p154 = por %p152, %p153
    %p155 = scmp.le.s32.totalorder 1, %s11
    %p156 = scmp.lt.s32.totalorder %s11, 3
    %p157 = pnand %p155, %p156
    %p158 = pneg %p157
    // Predicated region
    $region9: #{locally_hierarchical_net.1} parent=5 // pred_check
      _
    $region10: #{locally_hierarchical_net.1} parent=5 // pred_check_branch
      %160 = sbr.rel (%p157) target = $region12
    $region11: #{locally_hierarchical_net.1} parent=5 // pred_region
      %s161 = ssub.s32 %s11, 1
      // Predicated region
      $region13: #{locally_hierarchical_net.1} parent=11 // pred_check
        %p162 = pneg %p58
      $region14: #{locally_hierarchical_net.1} parent=11 // pred_check_branch
        %164 = sbr.rel (%p162) target = $region16
      $region15: #{locally_hierarchical_net.1} parent=11 // pred_region
        _
      $region16: #{locally_hierarchical_net.1} parent=11 // pred_fallthru
        _
      // Predicated region
      $region17: #{locally_hierarchical_net.1} parent=11 // pred_check
        %p165 = pneg %p79
      $region18: #{locally_hierarchical_net.1} parent=11 // pred_check_branch
        %167 = sbr.rel (%p165) target = $region20
      $region19: #{locally_hierarchical_net.1} parent=11 // pred_region
        _
      $region20: #{locally_hierarchical_net.1} parent=11 // pred_fallthru
        _
      // Predicated region
      $region21: #{locally_hierarchical_net.1} parent=11 // pred_check
        %p168 = pneg %p100
      $region22: #{locally_hierarchical_net.1} parent=11 // pred_check_branch
        %170 = sbr.rel (%p168) target = $region24
      $region23: #{locally_hierarchical_net.1} parent=11 // pred_region
        _
      $region24: #{locally_hierarchical_net.1} parent=11 // pred_fallthru
        _
      // Predicated region
      $region25: #{locally_hierarchical_net.1} parent=11 // pred_check
        %p171 = pneg %p121
      $region26: #{locally_hierarchical_net.1} parent=11 // pred_check_branch
        %173 = sbr.rel (%p171) target = $region28
      $region27: #{locally_hierarchical_net.1} parent=11 // pred_region
        _
      $region28: #{locally_hierarchical_net.1} parent=11 // pred_fallthru
        _
    $region12: #{locally_hierarchical_net.1} parent=5 // pred_fallthru
      _
    %p174 = scmp.lt.s32.totalorder %s11, 2
    // Predicated region
    $region29: #{locally_hierarchical_net.1} parent=5 // pred_check
      %p175 = pneg %p174
    $region30: #{locally_hierarchical_net.1} parent=5 // pred_check_branch
      %177 = sbr.rel (%p175) target = $region32
    $region31: #{locally_hierarchical_net.1} parent=5 // pred_region
      // Predicated region
      $region33: #{locally_hierarchical_net.1} parent=31 // pred_check
        %p178 = pneg %p31
      $region34: #{locally_hierarchical_net.1} parent=31 // pred_check_branch
        %180 = sbr.rel (%p178) target = $region36
      $region35: #{locally_hierarchical_net.1} parent=31 // pred_region
        %s181 = smul.u32 2, %s11
        %p182 = scmp.lt.s32.totalorder %s181, 3
        %s183 = scalar_select %p182, %s181, 3
        %s184 = smul.addr %s183, 4
        %s185 = scalar_lea.vmem %s0, %s184
        %s186 = smul.u32 2, %s11
      $region36: #{locally_hierarchical_net.1} parent=31 // pred_fallthru
        _
    $region32: #{locally_hierarchical_net.1} parent=5 // pred_fallthru
      _
    %p187 = scmp.le.s32.totalorder 1, %s11
    %p188 = scmp.lt.s32.totalorder %s11, 3
    %p189 = pnand %p187, %p188
    %p190 = pneg %p189
    // Predicated region
    $region37: #{locally_hierarchical_net.1} parent=5 // pred_check
      _
    $region38: #{locally_hierarchical_net.1} parent=5 // pred_check_branch
      %192 = sbr.rel (%p189) target = $region40
    $region39: #{locally_hierarchical_net.1} parent=5 // pred_region
      %s193 = ssub.s32 %s11, 1
      %s194 = smul.u32 2, %s16
      %p195 = scmp.lt.s32.totalorder %s194, 3
      %s196 = scalar_select %p195, %s194, 3
      %s197 = smul.addr %s196, 4
      %s198 = scalar_lea.vmem %s0, %s197
      %p199 = pneg %p37
      %p200 = pneg %p34
      %p201 = pneg %p58
      %p202 = pneg %p55
      %p203 = pneg %p79
      %p204 = pneg %p76
      %p205 = pneg %p100
      %p206 = pneg %p97
      %p207 = pneg %p121
      %p208 = pneg %p118
      %p209 = pneg %p147
      %p210 = pneg %p144
      %s211 = smul.u32 2, %s16
      %p212 = scmp.lt.s32.totalorder %s211, 3
      %s213 = scalar_select %p212, %s211, 3
      %s214 = smul.addr %s213, 8
      %s215 = scalar_lea.vmem %s5, %s214
      %s216 = smul.u32 2, %s16
      %p217 = scmp.lt.s32.totalorder %s216, 3
      %s218 = scalar_select %p217, %s216, 3
      %s219 = smul.addr %s218, 4
      %s220 = scalar_lea.vmem %s0, %s219
      %s221 = smul.u32 2, %s16
      %s222 = smul.u32 2, %s16
      %p223 = scmp.lt.s32.totalorder %s222, 3
      %s224 = scalar_select %p223, %s222, 3
      %s225 = smul.addr %s224, 8
      %s226 = scalar_lea.vmem %s5, %s225
      %s227 = smul.u32 2, %s16
      %v229 = vld [vmem:[%s1] sm:$0xff]
      %v230 = vld [vmem:[%s1 + $0x8] sm:$0xff]
      %v231 = vld [vmem:[%s1 + $0x10] sm:$0xff]
      %v232 = vld [vmem:[%s1 + $0x18] sm:$0xff]
      %v233 = vld [vmem:[%s1 + $0x20] sm:$0xff]
      %v234 = vld [vmem:[%s1 + $0x28] sm:$0xff]
      %v235 = vld [vmem:[%s1 + $0x30] sm:$0xff]
      %v236 = vld [vmem:[%s1 + $0x38] sm:$0xff]
      %v237 = vld [vmem:[%s2] sm:$0xf]
      %v238 = vld [vmem:[%s2 + $0x4] sm:$0xf]
      %v239 = vld [vmem:[%s2 + $0x8] sm:$0xf]
      %v240 = vld [vmem:[%s2 + $0xc] sm:$0xf]
      %v241 = vld [vmem:[%s2 + $0x10] sm:$0xf]
      %v242 = vld [vmem:[%s2 + $0x14] sm:$0xf]
      %v243 = vld [vmem:[%s2 + $0x18] sm:$0xf]
      %v244 = vld [vmem:[%s2 + $0x1c] sm:$0xf]
      %v245 = vld [vmem:[%s2 + $0x20] sm:$0xf]
      %v246 = vld [vmem:[%s2 + $0x24] sm:$0xf]
      %v247 = vld [vmem:[%s2 + $0x28] sm:$0xf]
      %v248 = vld [vmem:[%s2 + $0x2c] sm:$0xf]
      %v249 = vld [vmem:[%s2 + $0x30] sm:$0xf]
      %v250 = vld [vmem:[%s2 + $0x34] sm:$0xf]
      %v251 = vld [vmem:[%s2 + $0x38] sm:$0xf]
      %v252 = vld [vmem:[%s2 + $0x3c] sm:$0xf]
      %v253 = vld [vmem:[%s2 + $0x40] sm:$0xf]
      %v254 = vld [vmem:[%s2 + $0x44] sm:$0xf]
      %v255 = vld [vmem:[%s2 + $0x48] sm:$0xf]
      %v256 = vld [vmem:[%s2 + $0x4c] sm:$0xf]
      %v257 = vld [vmem:[%s2 + $0x50] sm:$0xf]
      %v258 = vld [vmem:[%s2 + $0x54] sm:$0xf]
      %v259 = vld [vmem:[%s2 + $0x58] sm:$0xf]
      %v260 = vld [vmem:[%s2 + $0x5c] sm:$0xf]
      %v261 = vld [vmem:[%s2 + $0x60] sm:$0xf]
      %v262 = vld [vmem:[%s2 + $0x64] sm:$0xf]
      %v263 = vld [vmem:[%s2 + $0x68] sm:$0xf]
      %v264 = vld [vmem:[%s2 + $0x6c] sm:$0xf]
      %v265 = vld [vmem:[%s2 + $0x70] sm:$0xf]
      %v266 = vld [vmem:[%s2 + $0x74] sm:$0xf]
      %v267 = vld [vmem:[%s2 + $0x78] sm:$0xf]
      %v268 = vld [vmem:[%s2 + $0x7c] sm:$0xf]
      %v269 = vld [vmem:[%s2 + $0x80] sm:$0xf]
      %v270 = vld [vmem:[%s2 + $0x84] sm:$0xf]
      %v271 = vld [vmem:[%s2 + $0x88] sm:$0xf]
      %v272 = vld [vmem:[%s2 + $0x8c] sm:$0xf]
      %v273 = vld [vmem:[%s2 + $0x90] sm:$0xf]
      %v274 = vld [vmem:[%s2 + $0x94] sm:$0xf]
      %v275 = vld [vmem:[%s2 + $0x98] sm:$0xf]
      %v276 = vld [vmem:[%s2 + $0x9c] sm:$0xf]
      %v277 = vld [vmem:[%s2 + $0xa0] sm:$0xf]
      %v278 = vld [vmem:[%s2 + $0xa4] sm:$0xf]
      %v279 = vld [vmem:[%s2 + $0xa8] sm:$0xf]
      %v280 = vld [vmem:[%s2 + $0xac] sm:$0xf]
      %v281 = vld [vmem:[%s2 + $0xb0] sm:$0xf]
      %v282 = vld [vmem:[%s2 + $0xb4] sm:$0xf]
      %v283 = vld [vmem:[%s2 + $0xb8] sm:$0xf]
      %v284 = vld [vmem:[%s2 + $0xbc] sm:$0xf]
      %v285 = vld [vmem:[%s2 + $0xc0] sm:$0xf]
      %v286 = vld [vmem:[%s2 + $0xc4] sm:$0xf]
      %v287 = vld [vmem:[%s2 + $0xc8] sm:$0xf]
      %v288 = vld [vmem:[%s2 + $0xcc] sm:$0xf]
      %v289 = vld [vmem:[%s2 + $0xd0] sm:$0xf]
      %v290 = vld [vmem:[%s2 + $0xd4] sm:$0xf]
      %v291 = vld [vmem:[%s2 + $0xd8] sm:$0xf]
      %v292 = vld [vmem:[%s2 + $0xdc] sm:$0xf]
      %v293 = vld [vmem:[%s2 + $0xe0] sm:$0xf]
      %v294 = vld [vmem:[%s2 + $0xe4] sm:$0xf]
      %v295 = vld [vmem:[%s2 + $0xe8] sm:$0xf]
      %v296 = vld [vmem:[%s2 + $0xec] sm:$0xf]
      %v297 = vld [vmem:[%s2 + $0xf0] sm:$0xf]
      %v298 = vld [vmem:[%s2 + $0xf4] sm:$0xf]
      %v299 = vld [vmem:[%s2 + $0xf8] sm:$0xf]
      %v300 = vld [vmem:[%s2 + $0xfc] sm:$0xf]
      %v301 = vld [vmem:[%s3] sm:$0xf]
      %v302 = vld [vmem:[%s3 + $0x4] sm:$0xf]
      %v303 = vld [vmem:[%s3 + $0x8] sm:$0xf]
      %v304 = vld [vmem:[%s3 + $0xc] sm:$0xf]
      %v305 = vld [vmem:[%s3 + $0x10] sm:$0xf]
      %v306 = vld [vmem:[%s3 + $0x14] sm:$0xf]
      %v307 = vld [vmem:[%s3 + $0x18] sm:$0xf]
      %v308 = vld [vmem:[%s3 + $0x1c] sm:$0xf]
      %v309 = vld [vmem:[%s3 + $0x20] sm:$0xf]
      %v310 = vld [vmem:[%s3 + $0x24] sm:$0xf]
      %v311 = vld [vmem:[%s3 + $0x28] sm:$0xf]
      %v312 = vld [vmem:[%s3 + $0x2c] sm:$0xf]
      %v313 = vld [vmem:[%s3 + $0x30] sm:$0xf]
      %v314 = vld [vmem:[%s3 + $0x34] sm:$0xf]
      %v315 = vld [vmem:[%s3 + $0x38] sm:$0xf]
      %v316 = vld [vmem:[%s3 + $0x3c] sm:$0xf]
      %v317 = vld [vmem:[%s3 + $0x40] sm:$0xf]
      %v318 = vld [vmem:[%s3 + $0x44] sm:$0xf]
      %v319 = vld [vmem:[%s3 + $0x48] sm:$0xf]
      %v320 = vld [vmem:[%s3 + $0x4c] sm:$0xf]
      %v321 = vld [vmem:[%s3 + $0x50] sm:$0xf]
      %v322 = vld [vmem:[%s3 + $0x54] sm:$0xf]
      %v323 = vld [vmem:[%s3 + $0x58] sm:$0xf]
      %v324 = vld [vmem:[%s3 + $0x5c] sm:$0xf]
      %v325 = vld [vmem:[%s3 + $0x60] sm:$0xf]
      %v326 = vld [vmem:[%s3 + $0x64] sm:$0xf]
      %v327 = vld [vmem:[%s3 + $0x68] sm:$0xf]
      %v328 = vld [vmem:[%s3 + $0x6c] sm:$0xf]
      %v329 = vld [vmem:[%s3 + $0x70] sm:$0xf]
      %v330 = vld [vmem:[%s3 + $0x74] sm:$0xf]
      %v331 = vld [vmem:[%s3 + $0x78] sm:$0xf]
      %v332 = vld [vmem:[%s3 + $0x7c] sm:$0xf]
      %v333 = vld [vmem:[%s4] sm:$0xf]
      %v334 = vld [vmem:[%s4 + $0x4] sm:$0xf]
      %v335 = vld [vmem:[%s4 + $0x8] sm:$0xf]
      %v336 = vld [vmem:[%s4 + $0xc] sm:$0xf]
      %v337 = vld [vmem:[%s4 + $0x10] sm:$0xf]
      %v338 = vld [vmem:[%s4 + $0x14] sm:$0xf]
      %v339 = vld [vmem:[%s4 + $0x18] sm:$0xf]
      %v340 = vld [vmem:[%s4 + $0x1c] sm:$0xf]
      %v341 = vld [vmem:[%s4 + $0x20] sm:$0xf]
      %v342 = vld [vmem:[%s4 + $0x24] sm:$0xf]
      %v343 = vld [vmem:[%s4 + $0x28] sm:$0xf]
      %v344 = vld [vmem:[%s4 + $0x2c] sm:$0xf]
      %v345 = vld [vmem:[%s4 + $0x30] sm:$0xf]
      %v346 = vld [vmem:[%s4 + $0x34] sm:$0xf]
      %v347 = vld [vmem:[%s4 + $0x38] sm:$0xf]
      %v348 = vld [vmem:[%s4 + $0x3c] sm:$0xf]
      %v349 = vld [vmem:[%s220] sm:$0xf]
      %v350 = vld [vmem:[%s220 + $0x4] sm:$0xf]
      %v353 = vunpack.c.l.b16 %v349
      %v354 = vunpack.c.l.b16 %v350
      %v355 = vpack.c.b16 %v354, %v353
      %v364 = vunpack.c.l.b16 %v229
      %v365 = vunpack.c.h.b16 %v229
      %v366 = vunpack.c.l.b16 %v230
      %v367 = vunpack.c.h.b16 %v230
      %v368 = vunpack.c.l.b16 %v231
      %v369 = vunpack.c.h.b16 %v231
      %v370 = vunpack.c.l.b16 %v232
      %v371 = vunpack.c.h.b16 %v232
      %v372 = vunpack.c.l.b16 %v233
      %v373 = vunpack.c.h.b16 %v233
      %v374 = vunpack.c.l.b16 %v234
      %v375 = vunpack.c.h.b16 %v234
      %v376 = vunpack.c.l.b16 %v235
      %v377 = vunpack.c.h.b16 %v235
      %v378 = vunpack.c.l.b16 %v236
      %v379 = vunpack.c.h.b16 %v236
      %v380 = vpack.c.b16 %v368, %v364
      %v381 = vpack.c.b16 %v369, %v365
      %v382 = vpack.c.b16 %v370, %v366
      %v383 = vpack.c.b16 %v371, %v367
      %v384 = vpack.c.b16 %v376, %v372
      %v385 = vpack.c.b16 %v377, %v373
      %v386 = vpack.c.b16 %v378, %v374
      %v387 = vpack.c.b16 %v379, %v375
      %vm396 = vcmask 261120
      %v398 = vsel %vm396, %v355, 0
      %400 = vmatprep.subr.bf16.mxu0 %v381
      %401 = vmatpush1.bf16.msra.mxu0 %v380
      %402 = vmatprep.subr.bf16.mxu0 %v385
      %403 = vmatpush1.bf16.msra.mxu0 %v384
      %404 = vmatprep.subr.bf16.mxu0 0
      %405 = vmatpush1.bf16.msra.mxu0 0
      %406 = vmatprep.subr.bf16.mxu0 0
      %407 = vmatpush1.bf16.msra.mxu0 0
      %408 = vmatprep.subr.bf16.mxu0 0
      %409 = vmatpush1.bf16.msra.mxu0 0
      %410 = vmatprep.subr.bf16.mxu0 0
      %411 = vmatpush1.bf16.msra.mxu0 0
      %412 = vmatprep.subr.bf16.mxu0 0
      %413 = vmatpush1.bf16.msra.mxu0 0
      %414 = vmatprep.subr.bf16.mxu0 0
      %415 = vmatpush1.bf16.msra.mxu0 0
      %416 = vmatprep.subr.bf16.mxu0 0
      %417 = vmatpush1.bf16.msra.mxu0 0
      %418 = vmatprep.subr.bf16.mxu0 0
      %419 = vmatpush1.bf16.msra.mxu0 0
      %420 = vmatprep.subr.bf16.mxu0 0
      %421 = vmatpush1.bf16.msra.mxu0 0
      %422 = vmatprep.subr.bf16.mxu0 0
      %423 = vmatpush1.bf16.msra.mxu0 0
      %424 = vmatprep.subr.bf16.mxu0 0
      %425 = vmatpush1.bf16.msra.mxu0 0
      %426 = vmatprep.subr.bf16.mxu0 0
      %427 = vmatpush1.bf16.msra.mxu0 0
      %428 = vmatprep.subr.bf16.mxu0 0
      %429 = vmatpush1.bf16.msra.mxu0 0
      %430 = vmatprep.subr.bf16.mxu0 0
      %431 = vmatpush1.bf16.msra.mxu0 0
      %432 = vmatprep.mubr.bf16.mxu0 0
      %433 = vmatmul.mubr.bf16.gmra.mrb[0].mxu0 %v398
      %v434 = vpop.f32.mrb[0].mxu0
      %v435 = vadd.f32 0.0, %v434
      %v436 = vpop.f32.mrb[0].mxu0
      %v437 = vadd.f32 0.0, %v436
      %v438 = vpop.f32.mrb[0].mxu0
      %v439 = vadd.f32 0.0, %v438
      %v440 = vpop.f32.mrb[0].mxu0
      %v441 = vadd.f32 0.0, %v440
      %442 = vdwg.mxu0
      %443 = vmatprep.subr.bf16.mxu0 %v383
      %444 = vmatpush1.bf16.msra.mxu0 %v382
      %445 = vmatprep.subr.bf16.mxu0 %v387
      %446 = vmatpush1.bf16.msra.mxu0 %v386
      %447 = vmatprep.subr.bf16.mxu0 0
      %448 = vmatpush1.bf16.msra.mxu0 0
      %449 = vmatprep.subr.bf16.mxu0 0
      %450 = vmatpush1.bf16.msra.mxu0 0
      %451 = vmatprep.subr.bf16.mxu0 0
      %452 = vmatpush1.bf16.msra.mxu0 0
      %453 = vmatprep.subr.bf16.mxu0 0
      %454 = vmatpush1.bf16.msra.mxu0 0
      %455 = vmatprep.subr.bf16.mxu0 0
      %456 = vmatpush1.bf16.msra.mxu0 0
      %457 = vmatprep.subr.bf16.mxu0 0
      %458 = vmatpush1.bf16.msra.mxu0 0
      %459 = vmatprep.subr.bf16.mxu0 0
      %460 = vmatpush1.bf16.msra.mxu0 0
      %461 = vmatprep.subr.bf16.mxu0 0
      %462 = vmatpush1.bf16.msra.mxu0 0
      %463 = vmatprep.subr.bf16.mxu0 0
      %464 = vmatpush1.bf16.msra.mxu0 0
      %465 = vmatprep.subr.bf16.mxu0 0
      %466 = vmatpush1.bf16.msra.mxu0 0
      %467 = vmatprep.subr.bf16.mxu0 0
      %468 = vmatpush1.bf16.msra.mxu0 0
      %469 = vmatprep.subr.bf16.mxu0 0
      %470 = vmatpush1.bf16.msra.mxu0 0
      %471 = vmatprep.subr.bf16.mxu0 0
      %472 = vmatpush1.bf16.msra.mxu0 0
      %473 = vmatprep.subr.bf16.mxu0 0
      %474 = vmatpush1.bf16.msra.mxu0 0
      %475 = vmatprep.mubr.bf16.mxu0 0
      %476 = vmatmul.mubr.bf16.gmra.mrb[0].mxu0 %v398
      %v477 = vpop.f32.mrb[0].mxu0
      %v478 = vadd.f32 0.0, %v477
      %v479 = vpop.f32.mrb[0].mxu0
      %v480 = vadd.f32 0.0, %v479
      %v481 = vpop.f32.mrb[0].mxu0
      %v482 = vadd.f32 0.0, %v481
      %v483 = vpop.f32.mrb[0].mxu0
      %v484 = vadd.f32 0.0, %v483
      %485 = vdwg.mxu0
      %v486 = vmax.f32 %v435, 0.0
      %v487 = vmax.f32 %v437, 0.0
      %v488 = vmax.f32 %v478, 0.0
      %v489 = vmax.f32 %v480, 0.0
      %v490 = vmax.f32 %v439, 0.0
      %v491 = vmax.f32 %v441, 0.0
      %v492 = vmax.f32 %v482, 0.0
      %v493 = vmax.f32 %v484, 0.0
      %v494 = vpack.c.bf16 %v490, %v486
      %v495 = vpack.c.bf16 %v491, %v487
      %v496 = vpack.c.bf16 %v492, %v488
      %v497 = vpack.c.bf16 %v493, %v489
      %v530 = vunpack.c.l.b16 %v237
      %v531 = vunpack.c.l.b16 %v238
      %v532 = vunpack.c.l.b16 %v239
      %v533 = vunpack.c.l.b16 %v240
      %v534 = vunpack.c.l.b16 %v241
      %v535 = vunpack.c.l.b16 %v242
      %v536 = vunpack.c.l.b16 %v243
      %v537 = vunpack.c.l.b16 %v244
      %v538 = vunpack.c.l.b16 %v245
      %v539 = vunpack.c.l.b16 %v246
      %v540 = vunpack.c.l.b16 %v247
      %v541 = vunpack.c.l.b16 %v248
      %v542 = vunpack.c.l.b16 %v249
      %v543 = vunpack.c.l.b16 %v250
      %v544 = vunpack.c.l.b16 %v251
      %v545 = vunpack.c.l.b16 %v252
      %v546 = vunpack.c.l.b16 %v253
      %v547 = vunpack.c.l.b16 %v254
      %v548 = vunpack.c.l.b16 %v255
      %v549 = vunpack.c.l.b16 %v256
      %v550 = vunpack.c.l.b16 %v257
      %v551 = vunpack.c.l.b16 %v258
      %v552 = vunpack.c.l.b16 %v259
      %v553 = vunpack.c.l.b16 %v260
      %v554 = vunpack.c.l.b16 %v261
      %v555 = vunpack.c.l.b16 %v262
      %v556 = vunpack.c.l.b16 %v263
      %v557 = vunpack.c.l.b16 %v264
      %v558 = vunpack.c.l.b16 %v265
      %v559 = vunpack.c.l.b16 %v266
      %v560 = vunpack.c.l.b16 %v267
      %v561 = vunpack.c.l.b16 %v268
      %v562 = vpack.c.b16 %v531, %v530
      %v563 = vpack.c.b16 %v533, %v532
      %v564 = vpack.c.b16 %v535, %v534
      %v565 = vpack.c.b16 %v537, %v536
      %v566 = vpack.c.b16 %v539, %v538
      %v567 = vpack.c.b16 %v541, %v540
      %v568 = vpack.c.b16 %v543, %v542
      %v569 = vpack.c.b16 %v545, %v544
      %v570 = vpack.c.b16 %v547, %v546
      %v571 = vpack.c.b16 %v549, %v548
      %v572 = vpack.c.b16 %v551, %v550
      %v573 = vpack.c.b16 %v553, %v552
      %v574 = vpack.c.b16 %v555, %v554
      %v575 = vpack.c.b16 %v557, %v556
      %v576 = vpack.c.b16 %v559, %v558
      %v577 = vpack.c.b16 %v561, %v560
      %594 = vmatprep.subr.bf16.mxu0 0
      %595 = vmatpush1.bf16.msra.mxu0 %v562
      %596 = vmatprep.subr.bf16.mxu0 0
      %597 = vmatpush1.bf16.msra.mxu0 %v563
      %598 = vmatprep.subr.bf16.mxu0 0
      %599 = vmatpush1.bf16.msra.mxu0 %v564
      %600 = vmatprep.subr.bf16.mxu0 0
      %601 = vmatpush1.bf16.msra.mxu0 %v565
      %602 = vmatprep.subr.bf16.mxu0 0
      %603 = vmatpush1.bf16.msra.mxu0 %v566
      %604 = vmatprep.subr.bf16.mxu0 0
      %605 = vmatpush1.bf16.msra.mxu0 %v567
      %606 = vmatprep.subr.bf16.mxu0 0
      %607 = vmatpush1.bf16.msra.mxu0 %v568
      %608 = vmatprep.subr.bf16.mxu0 0
      %609 = vmatpush1.bf16.msra.mxu0 %v569
      %610 = vmatprep.subr.bf16.mxu0 0
      %611 = vmatpush1.bf16.msra.mxu0 %v570
      %612 = vmatprep.subr.bf16.mxu0 0
      %613 = vmatpush1.bf16.msra.mxu0 %v571
      %614 = vmatprep.subr.bf16.mxu0 0
      %615 = vmatpush1.bf16.msra.mxu0 %v572
      %616 = vmatprep.subr.bf16.mxu0 0
      %617 = vmatpush1.bf16.msra.mxu0 %v573
      %618 = vmatprep.subr.bf16.mxu0 0
      %619 = vmatpush1.bf16.msra.mxu0 %v574
      %620 = vmatprep.subr.bf16.mxu0 0
      %621 = vmatpush1.bf16.msra.mxu0 %v575
      %622 = vmatprep.subr.bf16.mxu0 0
      %623 = vmatpush1.bf16.msra.mxu0 %v576
      %624 = vmatprep.subr.bf16.mxu0 0
      %625 = vmatpush1.bf16.msra.mxu0 %v577
      %626 = vmatprep.mubr.bf16.mxu0 %v495
      %627 = vmatmul.mubr.bf16.gmra.mrb[0].mxu0 %v494
      %v628 = vpop.f32.mrb[0].mxu0
      %v629 = vadd.f32 0.0, %v628
      %v630 = vpop.f32.mrb[0].mxu0
      %v631 = vpop.f32.mrb[0].mxu0
      %v632 = vadd.f32 0.0, %v631
      %v633 = vpop.f32.mrb[0].mxu0
      %634 = vdwg.mxu0
      %v635 = vmax.f32 %v629, 0.0
      %v636 = vmax.f32 %v632, 0.0
      %v637 = vpack.c.bf16 %v636, %v635
      %v670 = vunpack.c.l.b16 %v269
      %v671 = vunpack.c.l.b16 %v270
      %v672 = vunpack.c.l.b16 %v271
      %v673 = vunpack.c.l.b16 %v272
      %v674 = vunpack.c.l.b16 %v273
      %v675 = vunpack.c.l.b16 %v274
      %v676 = vunpack.c.l.b16 %v275
      %v677 = vunpack.c.l.b16 %v276
      %v678 = vunpack.c.l.b16 %v277
      %v679 = vunpack.c.l.b16 %v278
      %v680 = vunpack.c.l.b16 %v279
      %v681 = vunpack.c.l.b16 %v280
      %v682 = vunpack.c.l.b16 %v281
      %v683 = vunpack.c.l.b16 %v282
      %v684 = vunpack.c.l.b16 %v283
      %v685 = vunpack.c.l.b16 %v284
      %v686 = vunpack.c.l.b16 %v285
      %v687 = vunpack.c.l.b16 %v286
      %v688 = vunpack.c.l.b16 %v287
      %v689 = vunpack.c.l.b16 %v288
      %v690 = vunpack.c.l.b16 %v289
      %v691 = vunpack.c.l.b16 %v290
      %v692 = vunpack.c.l.b16 %v291
      %v693 = vunpack.c.l.b16 %v292
      %v694 = vunpack.c.l.b16 %v293
      %v695 = vunpack.c.l.b16 %v294
      %v696 = vunpack.c.l.b16 %v295
      %v697 = vunpack.c.l.b16 %v296
      %v698 = vunpack.c.l.b16 %v297
      %v699 = vunpack.c.l.b16 %v298
      %v700 = vunpack.c.l.b16 %v299
      %v701 = vunpack.c.l.b16 %v300
      %v702 = vpack.c.b16 %v671, %v670
      %v703 = vpack.c.b16 %v673, %v672
      %v704 = vpack.c.b16 %v675, %v674
      %v705 = vpack.c.b16 %v677, %v676
      %v706 = vpack.c.b16 %v679, %v678
      %v707 = vpack.c.b16 %v681, %v680
      %v708 = vpack.c.b16 %v683, %v682
      %v709 = vpack.c.b16 %v685, %v684
      %v710 = vpack.c.b16 %v687, %v686
      %v711 = vpack.c.b16 %v689, %v688
      %v712 = vpack.c.b16 %v691, %v690
      %v713 = vpack.c.b16 %v693, %v692
      %v714 = vpack.c.b16 %v695, %v694
      %v715 = vpack.c.b16 %v697, %v696
      %v716 = vpack.c.b16 %v699, %v698
      %v717 = vpack.c.b16 %v701, %v700
      %734 = vmatprep.subr.bf16.mxu0 0
      %735 = vmatpush1.bf16.msra.mxu0 %v702
      %736 = vmatprep.subr.bf16.mxu0 0
      %737 = vmatpush1.bf16.msra.mxu0 %v703
      %738 = vmatprep.subr.bf16.mxu0 0
      %739 = vmatpush1.bf16.msra.mxu0 %v704
      %740 = vmatprep.subr.bf16.mxu0 0
      %741 = vmatpush1.bf16.msra.mxu0 %v705
      %742 = vmatprep.subr.bf16.mxu0 0
      %743 = vmatpush1.bf16.msra.mxu0 %v706
      %744 = vmatprep.subr.bf16.mxu0 0
      %745 = vmatpush1.bf16.msra.mxu0 %v707
      %746 = vmatprep.subr.bf16.mxu0 0
      %747 = vmatpush1.bf16.msra.mxu0 %v708
      %748 = vmatprep.subr.bf16.mxu0 0
      %749 = vmatpush1.bf16.msra.mxu0 %v709
      %750 = vmatprep.subr.bf16.mxu0 0
      %751 = vmatpush1.bf16.msra.mxu0 %v710
      %752 = vmatprep.subr.bf16.mxu0 0
      %753 = vmatpush1.bf16.msra.mxu0 %v711
      %754 = vmatprep.subr.bf16.mxu0 0
      %755 = vmatpush1.bf16.msra.mxu0 %v712
      %756 = vmatprep.subr.bf16.mxu0 0
      %757 = vmatpush1.bf16.msra.mxu0 %v713
      %758 = vmatprep.subr.bf16.mxu0 0
      %759 = vmatpush1.bf16.msra.mxu0 %v714
      %760 = vmatprep.subr.bf16.mxu0 0
      %761 = vmatpush1.bf16.msra.mxu0 %v715
      %762 = vmatprep.subr.bf16.mxu0 0
      %763 = vmatpush1.bf16.msra.mxu0 %v716
      %764 = vmatprep.subr.bf16.mxu0 0
      %765 = vmatpush1.bf16.msra.mxu0 %v717
      %766 = vmatprep.mubr.bf16.mxu0 %v497
      %767 = vmatmul.mubr.bf16.gmra.mrb[0].mxu0 %v496
      %v768 = vpop.f32.mrb[0].mxu0
      %v769 = vadd.f32 0.0, %v768
      %v770 = vpop.f32.mrb[0].mxu0
      %v771 = vpop.f32.mrb[0].mxu0
      %v772 = vadd.f32 0.0, %v771
      %v773 = vpop.f32.mrb[0].mxu0
      %774 = vdwg.mxu0
      %v775 = vmax.f32 %v769, 0.0
      %v776 = vmax.f32 %v772, 0.0
      %v777 = vpack.c.bf16 %v776, %v775
      %v810 = vunpack.c.l.b16 %v301
      %v811 = vunpack.c.l.b16 %v302
      %v812 = vunpack.c.l.b16 %v303
      %v813 = vunpack.c.l.b16 %v304
      %v814 = vunpack.c.l.b16 %v305
      %v815 = vunpack.c.l.b16 %v306
      %v816 = vunpack.c.l.b16 %v307
      %v817 = vunpack.c.l.b16 %v308
      %v818 = vunpack.c.l.b16 %v309
      %v819 = vunpack.c.l.b16 %v310
      %v820 = vunpack.c.l.b16 %v311
      %v821 = vunpack.c.l.b16 %v312
      %v822 = vunpack.c.l.b16 %v313
      %v823 = vunpack.c.l.b16 %v314
      %v824 = vunpack.c.l.b16 %v315
      %v825 = vunpack.c.l.b16 %v316
      %v826 = vunpack.c.l.b16 %v317
      %v827 = vunpack.c.l.b16 %v318
      %v828 = vunpack.c.l.b16 %v319
      %v829 = vunpack.c.l.b16 %v320
      %v830 = vunpack.c.l.b16 %v321
      %v831 = vunpack.c.l.b16 %v322
      %v832 = vunpack.c.l.b16 %v323
      %v833 = vunpack.c.l.b16 %v324
      %v834 = vunpack.c.l.b16 %v325
      %v835 = vunpack.c.l.b16 %v326
      %v836 = vunpack.c.l.b16 %v327
      %v837 = vunpack.c.l.b16 %v328
      %v838 = vunpack.c.l.b16 %v329
      %v839 = vunpack.c.l.b16 %v330
      %v840 = vunpack.c.l.b16 %v331
      %v841 = vunpack.c.l.b16 %v332
      %v842 = vpack.c.b16 %v811, %v810
      %v843 = vpack.c.b16 %v813, %v812
      %v844 = vpack.c.b16 %v815, %v814
      %v845 = vpack.c.b16 %v817, %v816
      %v846 = vpack.c.b16 %v819, %v818
      %v847 = vpack.c.b16 %v821, %v820
      %v848 = vpack.c.b16 %v823, %v822
      %v849 = vpack.c.b16 %v825, %v824
      %v850 = vpack.c.b16 %v827, %v826
      %v851 = vpack.c.b16 %v829, %v828
      %v852 = vpack.c.b16 %v831, %v830
      %v853 = vpack.c.b16 %v833, %v832
      %v854 = vpack.c.b16 %v835, %v834
      %v855 = vpack.c.b16 %v837, %v836
      %v856 = vpack.c.b16 %v839, %v838
      %v857 = vpack.c.b16 %v841, %v840
      %874 = vmatprep.subr.bf16.mxu0 0
      %875 = vmatpush1.bf16.msra.mxu0 %v842
      %876 = vmatprep.subr.bf16.mxu0 0
      %877 = vmatpush1.bf16.msra.mxu0 %v843
      %878 = vmatprep.subr.bf16.mxu0 0
      %879 = vmatpush1.bf16.msra.mxu0 %v844
      %880 = vmatprep.subr.bf16.mxu0 0
      %881 = vmatpush1.bf16.msra.mxu0 %v845
      %882 = vmatprep.subr.bf16.mxu0 0
      %883 = vmatpush1.bf16.msra.mxu0 %v846
      %884 = vmatprep.subr.bf16.mxu0 0
      %885 = vmatpush1.bf16.msra.mxu0 %v847
      %886 = vmatprep.subr.bf16.mxu0 0
      %887 = vmatpush1.bf16.msra.mxu0 %v848
      %888 = vmatprep.subr.bf16.mxu0 0
      %889 = vmatpush1.bf16.msra.mxu0 %v849
      %890 = vmatprep.subr.bf16.mxu0 0
      %891 = vmatpush1.bf16.msra.mxu0 %v850
      %892 = vmatprep.subr.bf16.mxu0 0
      %893 = vmatpush1.bf16.msra.mxu0 %v851
      %894 = vmatprep.subr.bf16.mxu0 0
      %895 = vmatpush1.bf16.msra.mxu0 %v852
      %896 = vmatprep.subr.bf16.mxu0 0
      %897 = vmatpush1.bf16.msra.mxu0 %v853
      %898 = vmatprep.subr.bf16.mxu0 0
      %899 = vmatpush1.bf16.msra.mxu0 %v854
      %900 = vmatprep.subr.bf16.mxu0 0
      %901 = vmatpush1.bf16.msra.mxu0 %v855
      %902 = vmatprep.subr.bf16.mxu0 0
      %903 = vmatpush1.bf16.msra.mxu0 %v856
      %904 = vmatprep.subr.bf16.mxu0 0
      %905 = vmatpush1.bf16.msra.mxu0 %v857
      %906 = vmatprep.mubr.bf16.mxu0 %v777
      %907 = vmatmul.mubr.bf16.gmra.mrb[0].mxu0 %v637
      %v908 = vpop.f32.mrb[0].mxu0
      %v909 = vadd.f32 0.0, %v908
      %v910 = vpop.f32.mrb[0].mxu0
      %v911 = vpop.f32.mrb[0].mxu0
      %v912 = vadd.f32 0.0, %v911
      %v913 = vpop.f32.mrb[0].mxu0
      %914 = vdwg.mxu0
      %v915 = vmax.f32 %v909, 0.0
      %v916 = vmax.f32 %v912, 0.0
      %v917 = vpack.c.bf16 %v916, %v915
      %v934 = vunpack.c.l.b16 %v333
      %v935 = vunpack.c.l.b16 %v334
      %v936 = vunpack.c.l.b16 %v335
      %v937 = vunpack.c.l.b16 %v336
      %v938 = vunpack.c.l.b16 %v337
      %v939 = vunpack.c.l.b16 %v338
      %v940 = vunpack.c.l.b16 %v339
      %v941 = vunpack.c.l.b16 %v340
      %v942 = vunpack.c.l.b16 %v341
      %v943 = vunpack.c.l.b16 %v342
      %v944 = vunpack.c.l.b16 %v343
      %v945 = vunpack.c.l.b16 %v344
      %v946 = vunpack.c.l.b16 %v345
      %v947 = vunpack.c.l.b16 %v346
      %v948 = vunpack.c.l.b16 %v347
      %v949 = vunpack.c.l.b16 %v348
      %v950 = vpack.c.b16 %v935, %v934
      %v951 = vpack.c.b16 %v937, %v936
      %v952 = vpack.c.b16 %v939, %v938
      %v953 = vpack.c.b16 %v941, %v940
      %v954 = vpack.c.b16 %v943, %v942
      %v955 = vpack.c.b16 %v945, %v944
      %v956 = vpack.c.b16 %v947, %v946
      %v957 = vpack.c.b16 %v949, %v948
      %966 = vmatprep.subr.bf16.mxu0 0
      %967 = vmatpush1.bf16.msra.mxu0 %v950
      %968 = vmatprep.subr.bf16.mxu0 0
      %969 = vmatpush1.bf16.msra.mxu0 %v951
      %970 = vmatprep.subr.bf16.mxu0 0
      %971 = vmatpush1.bf16.msra.mxu0 %v952
      %972 = vmatprep.subr.bf16.mxu0 0
      %973 = vmatpush1.bf16.msra.mxu0 %v953
      %974 = vmatprep.subr.bf16.mxu0 0
      %975 = vmatpush1.bf16.msra.mxu0 %v954
      %976 = vmatprep.subr.bf16.mxu0 0
      %977 = vmatpush1.bf16.msra.mxu0 %v955
      %978 = vmatprep.subr.bf16.mxu0 0
      %979 = vmatpush1.bf16.msra.mxu0 %v956
      %980 = vmatprep.subr.bf16.mxu0 0
      %981 = vmatpush1.bf16.msra.mxu0 %v957
      %982 = vmatprep.subr.bf16.mxu0 0
      %983 = vmatpush1.bf16.msra.mxu0 0
      %984 = vmatprep.subr.bf16.mxu0 0
      %985 = vmatpush1.bf16.msra.mxu0 0
      %986 = vmatprep.subr.bf16.mxu0 0
      %987 = vmatpush1.bf16.msra.mxu0 0
      %988 = vmatprep.subr.bf16.mxu0 0
      %989 = vmatpush1.bf16.msra.mxu0 0
      %990 = vmatprep.subr.bf16.mxu0 0
      %991 = vmatpush1.bf16.msra.mxu0 0
      %992 = vmatprep.subr.bf16.mxu0 0
      %993 = vmatpush1.bf16.msra.mxu0 0
      %994 = vmatprep.subr.bf16.mxu0 0
      %995 = vmatpush1.bf16.msra.mxu0 0
      %996 = vmatprep.subr.bf16.mxu0 0
      %997 = vmatpush1.bf16.msra.mxu0 0
      %998 = vmatprep.mubr.bf16.mxu0 0
      %999 = vmatmul.mubr.bf16.gmra.mrb[0].mxu0 %v917
      %v1000 = vpop.f32.mrb[0].mxu0
      %v1001 = vadd.f32 0.0, %v1000
      %v1002 = vpop.f32.mrb[0].mxu0
      %v1003 = vpop.f32.mrb[0].mxu0
      %v1004 = vadd.f32 0.0, %v1003
      %v1005 = vpop.f32.mrb[0].mxu0
      %1006 = vdwg.mxu0
      %vm1007 = vcmask 80896
      %1008 = vst.msk [vmem:[%s226] sm:$0xff] %vm1007, %v1001
      %1009 = vst.msk [vmem:[%s226 + $0x8] sm:$0xff] %vm1007, %v1004
      %s1010 = smul.u32 2, %s16
      %p1011 = scmp.lt.s32.totalorder %s1010, 3
      %s1012 = scalar_select %p1011, %s1010, 3
      %s1013 = smul.addr %s1012, 8
      %s1014 = scalar_lea.vmem %s5, %s1013
      // Predicated region
      $region41: #{locally_hierarchical_net.1} parent=39 // pred_check
        %p1015 = pneg %p144
      $region42: #{locally_hierarchical_net.1} parent=39 // pred_check_branch
        %1017 = sbr.rel (%p1015) target = $region44
      $region43: #{locally_hierarchical_net.1} parent=39 // pred_region
        %s1018 = smul.u32 2, %s16
      $region44: #{locally_hierarchical_net.1} parent=39 // pred_fallthru
        _
    $region40: #{locally_hierarchical_net.1} parent=5 // pred_fallthru
      _
    %p1019 = scmp.le.s32.totalorder 2, %s11
    // Predicated region
    $region45: #{locally_hierarchical_net.1} parent=5 // pred_check
      %p1020 = pneg %p1019
    $region46: #{locally_hierarchical_net.1} parent=5 // pred_check_branch
      %1022 = sbr.rel (%p1020) target = $region48
    $region47: #{locally_hierarchical_net.1} parent=5 // pred_region
      %s1023 = ssub.s32 %s11, 2
      // Predicated region
      $region49: #{locally_hierarchical_net.1} parent=47 // pred_check
        %p1024 = pneg %p150
      $region50: #{locally_hierarchical_net.1} parent=47 // pred_check_branch
        %1026 = sbr.rel (%p1024) target = $region52
      $region51: #{locally_hierarchical_net.1} parent=47 // pred_region
        %s1027 = smul.u32 2, %s17
        %p1028 = scmp.lt.s32.totalorder %s1027, 3
        %s1029 = scalar_select %p1028, %s1027, 3
        %s1030 = smul.addr %s1029, 8
        %s1031 = scalar_lea.vmem %s5, %s1030
      $region52: #{locally_hierarchical_net.1} parent=47 // pred_fallthru
        _
    $region48: #{locally_hierarchical_net.1} parent=5 // pred_fallthru
      _
  $region6: #{locally_hierarchical_net.1} parent=0 // loop_footer
    %s15 = sadd.s32 1, %s11
  $region7: #{locally_hierarchical_net.1} parent=0 // loop_footer_branch
    %10 = sbr.rel target = $region3
  $region8: #{locally_hierarchical_net.1} parent=0 // loop_exit
    _

</llo_original>
